<compile_context>
chip_gen: v5e
topology: v5e:2x2
jax: 0.10.0
libtpu: 0.0.40
codegen_flags: <defaults>
</compile_context>

<pallas_src>
import jax
import jax.numpy as jnp
from jax.experimental import pallas as pl
from jax.experimental.pallas import tpu as pltpu

_SUBLANE = 8  # f32 sublane height (row-tile alignment)


def _linear_kernel(x_ref, w_ref, b_ref, o_ref):
    # x_ref : (tm, K)   VMEM block of input rows
    # w_ref : (K, N)    VMEM, pre-transposed weight (resident: block idx const)
    # b_ref : (1, N)    VMEM bias row (resident)
    # o_ref : (tm, N)   VMEM output block (true width N, no lane padding)
    acc = jnp.dot(x_ref[...], w_ref[...], preferred_element_type=jnp.float32)
    o_ref[...] = (acc + b_ref[...]).astype(o_ref.dtype)


def _round_up(v, m):
    return ((v + m - 1) // m) * m


def _pick_row_tile(batch, k, n, itemsize, vmem_budget=24 * 1024 * 1024):
    """Pick the batch row tile independently of B (grid uses cdiv + ragged tail)."""
    # Resident weight + bias, conservatively counted double-buffered.
    fixed = 2 * (k * n + n) * itemsize
    # Double-buffered x block + output block, per row.
    per_row = 2 * (k + n) * itemsize
    avail = max(vmem_budget - fixed, per_row * _SUBLANE)
    tm = min(8192, avail // per_row)
    # v7x megacore: guarantee >= 2 grid points when there is enough work so the
    # "parallel" batch axis is actually split across both TensorCores.
    if batch >= 2 * _SUBLANE:
        tm = min(tm, _round_up(pl.cdiv(batch, 2), _SUBLANE))
    # Never larger than the (sublane-rounded) batch; multiple of 8 rows.
    tm = min(tm, _round_up(batch, _SUBLANE))
    tm = max(_SUBLANE, (tm // _SUBLANE) * _SUBLANE)
    return int(tm)


def super_simple_predictor(x, weight, bias, *, compute_dtype=None):
    """x: (B, input_dim); weight: (output_dim, input_dim); bias: (output_dim,).

    compute_dtype: optionally jnp.bfloat16 to halve HBM read bytes / double MXU
    rate at scale (accumulation stays f32, output stays in x's original dtype).
    Default None keeps the module's exact f32 numerics.
    """
    B, K = x.shape
    N, K_w = weight.shape
    assert K == K_w and bias.shape == (N,)

    out_dtype = x.dtype
    if compute_dtype is not None:
        x = x.astype(compute_dtype)
        weight = weight.astype(compute_dtype)

    # One-time layout change in the wrapper: feed the MXU (M,K)x(K,N) directly.
    w_t = weight.T                 # (K, N)
    b_row = bias.reshape(1, N)     # (1, N); stays f32 — added to the f32 acc

    itemsize = jnp.dtype(x.dtype).itemsize
    tm = _pick_row_tile(B, K, N, itemsize)
    grid_m = pl.cdiv(B, tm)        # ragged final block handled by Pallas

    vmem_needed = 2 * (K * N + N) * 4 + 2 * tm * (K + N) * itemsize
    vmem_limit = int(min(max(2 * vmem_needed + (2 << 20), 32 << 20), 64 << 20))

    cost = pl.CostEstimate(
        flops=2 * B * K * N,
        transcendentals=0,
        bytes_accessed=itemsize * (B * K + K * N) + 4 * (N + B * N),
    )

    out = pl.pallas_call(
        _linear_kernel,
        out_shape=jax.ShapeDtypeStruct((B, N), out_dtype),
        grid=(grid_m,),
        in_specs=[
            pl.BlockSpec((tm, K), lambda i: (i, 0)),   # x rows: pipelined over batch
            pl.BlockSpec((K, N), lambda i: (0, 0)),    # weight: resident (DMA'd once)
            pl.BlockSpec((1, N), lambda i: (0, 0)),    # bias: resident
        ],
        out_specs=pl.BlockSpec((tm, N), lambda i: (i, 0)),
        compiler_params=pltpu.CompilerParams(
            dimension_semantics=("parallel",),  # batch tiles across TCs on v7x
            vmem_limit_bytes=vmem_limit,
        ),
        cost_estimate=cost,
    )(x, w_t, b_row)
    return out


if __name__ == "__main__":
    # Small shapes consistent with the module: x (batch, input_dim).
    batch, input_dim, output_dim = 8, 32, 16

    key = jax.random.PRNGKey(0)
    kx, kw, kb = jax.random.split(key, 3)

    x = jax.random.normal(kx, (batch, input_dim), dtype=jnp.float32)
    # Deterministic synthetic parameters (nn.Linear(input_dim, output_dim) shapes).
    bound = 1.0 / (input_dim ** 0.5)
    weight = jax.random.uniform(
        kw, (output_dim, input_dim), dtype=jnp.float32, minval=-bound, maxval=bound
    )
    bias = jax.random.uniform(
        kb, (output_dim,), dtype=jnp.float32, minval=-bound, maxval=bound
    )

    fwd = jax.jit(super_simple_predictor)
    out = fwd(x, weight, bias)
    out = jax.block_until_ready(out)

    # Correctness check against the plain-JAX reference of the PyTorch forward.
    ref = x @ weight.T + bias
    assert out.shape == (batch, output_dim)
    assert jnp.allclose(out, ref, atol=1e-5, rtol=1e-5)

    print("KERNEL_OK")
</pallas_src>

<mosaic_0001>
module attributes {stable_mosaic.version = 11 : i64} {
  func.func @_linear_kernel(%arg0: i32, %arg1: memref<8x32xf32, #tpu.memory_space<vmem>>, %arg2: memref<32x16xf32, #tpu.memory_space<vmem>>, %arg3: memref<1x16xf32, #tpu.memory_space<vmem>>, %arg4: memref<8x16xf32, #tpu.memory_space<vmem>>) attributes {dimension_semantics = [#tpu.dimension_semantics<parallel>], iteration_bounds = array<i64: 1>, scalar_prefetch = 0 : i64, scratch_operands = 0 : i64, tpu.core_type = #tpu.core_type<tc>, window_params = [{transform_indices = @transform_0, window_bounds = array<i64: 8, 32>}, {pipeline_mode = #tpu.pipeline_mode<synchronous>, transform_indices = @transform_1, window_bounds = array<i64: 32, 16>}, {pipeline_mode = #tpu.pipeline_mode<synchronous>, transform_indices = @transform_2, window_bounds = array<i64: 1, 16>}, {transform_indices = @transform_3, window_bounds = array<i64: 8, 16>}]} {
    %c0 = arith.constant 0 : index
    %c0_0 = arith.constant 0 : index
    %0 = vector.load %arg1[%c0, %c0_0] : memref<8x32xf32, #tpu.memory_space<vmem>>, vector<8x32xf32>
    %c0_1 = arith.constant 0 : index
    %c0_2 = arith.constant 0 : index
    %1 = vector.load %arg2[%c0_1, %c0_2] : memref<32x16xf32, #tpu.memory_space<vmem>>, vector<32x16xf32>
    %cst = arith.constant dense<0.000000e+00> : vector<8x16xf32>
    %2 = tpu.matmul %0, %1, %cst {dimension_numbers = #tpu.dot_dimension_numbers<[1], [0], [0], [1], [0, 0, 1, 1], [], []>} : vector<8x32xf32>, vector<32x16xf32>, vector<8x16xf32> -> vector<8x16xf32>
    %c0_3 = arith.constant 0 : index
    %c0_4 = arith.constant 0 : index
    %3 = vector.load %arg3[%c0_3, %c0_4] : memref<1x16xf32, #tpu.memory_space<vmem>>, vector<1x16xf32>
    %4 = vector.broadcast %3 : vector<1x16xf32> to vector<8x16xf32>
    %5 = arith.addf %2, %4 : vector<8x16xf32>
    %c0_5 = arith.constant 0 : index
    %c0_6 = arith.constant 0 : index
    %6 = vector.load %arg4[%c0_5, %c0_6] : memref<8x16xf32, #tpu.memory_space<vmem>>, vector<8x16xf32>
    tpu.vector_store %arg4[%c0_5, %c0_6], %5 {strides = array<i32>} : memref<8x16xf32, #tpu.memory_space<vmem>>, vector<8x16xf32>,
    return
  }
  func.func @transform_0(%arg0: i32) -> (i32, i32) {
    %c0_i32 = arith.constant 0 : i32
    %c0_i32_0 = arith.constant 0 : i32
    return %arg0, %c0_i32 : i32, i32
  }
  func.func @transform_1(%arg0: i32) -> (i32, i32) {
    %c0_i32 = arith.constant 0 : i32
    %c0_i32_0 = arith.constant 0 : i32
    %c0_i32_1 = arith.constant 0 : i32
    return %c0_i32, %c0_i32_0 : i32, i32
  }
  func.func @transform_2(%arg0: i32) -> (i32, i32) {
    %c0_i32 = arith.constant 0 : i32
    %c0_i32_0 = arith.constant 0 : i32
    %c0_i32_1 = arith.constant 0 : i32
    return %c0_i32, %c0_i32_0 : i32, i32
  }
  func.func @transform_3(%arg0: i32) -> (i32, i32) {
    %c0_i32 = arith.constant 0 : i32
    %c0_i32_0 = arith.constant 0 : i32
    return %arg0, %c0_i32 : i32, i32
  }
}

</mosaic_0001>

<llo_original>
// kernel: super_simple_predictor.1
$region0: #{super_simple_predictor.1}
  #allocation0 [shape = 'u32[]', space=smem, size = 0x4, offset = 0x4, fixed_abs, tag = 'smem constant byte address 0x4 - core index']
  #allocation1 [shape = 'u32[72,128]{1,0:T(1,128)}', space=vmem, size = 0x9000, scoped, tag = 'internal scratch']
  %s0 = inlined_call_operand.vmem [shape: f32[8,32], index: 0, kind: input, shape index: {}]
  %s1 = inlined_call_operand.vmem [shape: f32[32,16], index: 1, kind: input, shape index: {}]
  %s2 = inlined_call_operand.vmem [shape: f32[1,16], index: 2, kind: input, shape index: {}]
  %s3 = inlined_call_operand.hbm [shape: f32[8,16], index: 3, kind: output, shape index: {}]
  %s4 = sld [smem:[#allocation0]]
  $region22: #{super_simple_predictor.1} parent=0
    _
  %s6 = ssub.s32 1, %s4
  %s7 = scalar_select 0, %s6, %s4
  $region1: #{super_simple_predictor.1} parent=0
    #allocation2 [shape = 'u8[4096]{0}', space=vmem, size = 0x1000, scoped, tag = 'output window, operand 0, single buffered']
    #allocation3 [shape = 's32[1]{0}', space=sflag, size = 0x4, scoped, tag = 'scoped memory for super_simple_predictor.1']
    %8 = vsyncpa [#allocation3], 0
    // Predicated region
    $region2: #{super_simple_predictor.1} parent=1 // pred_check
      _
    $region3: #{super_simple_predictor.1} parent=1 // pred_check_branch
      %10 = sbr.rel (0) target = $region5
    $region4: #{super_simple_predictor.1} parent=1 // pred_region
      _
    $region5: #{super_simple_predictor.1} parent=1 // pred_fallthru
      _
    // Predicated region
    $region6: #{super_simple_predictor.1} parent=1 // pred_check
      _
    $region7: #{super_simple_predictor.1} parent=1 // pred_check_branch
      %12 = sbr.rel (0) target = $region9
    $region8: #{super_simple_predictor.1} parent=1 // pred_region
      _
    $region9: #{super_simple_predictor.1} parent=1 // pred_fallthru
      _
    // Predicated region
    $region10: #{super_simple_predictor.1} parent=1 // pred_check
      _
    $region11: #{super_simple_predictor.1} parent=1 // pred_check_branch
      %14 = sbr.rel (0) target = $region13
    $region12: #{super_simple_predictor.1} parent=1 // pred_region
      _
    $region13: #{super_simple_predictor.1} parent=1 // pred_fallthru
      _
    %v15 = vld [vmem:[%s0] sm:$0xff]
    %v16 = vld [vmem:[%s1] sm:$0xff]
    %v17 = vld [vmem:[%s1 + $0x8] sm:$0xff]
    %v18 = vld [vmem:[%s1 + $0x10] sm:$0xff]
    %v19 = vld [vmem:[%s1 + $0x18] sm:$0xff]
    %v20 = vld [vmem:[%s2] sm:$0x1]
    %v22 = vperm.slane %v20, 0
    %vm24 = vcmask 261120
    %v26 = vsel %vm24, %v15, 0
    %28 = vmatpush.msra.mxu0 0.0
    %29 = vmatpush.msra.mxu0 0.0
    %30 = vmatpush.msra.mxu0 0.0
    %31 = vmatpush.msra.mxu0 0.0
    %32 = vmatpush.msra.mxu0 0.0
    %33 = vmatpush.msra.mxu0 0.0
    %34 = vmatpush.msra.mxu0 0.0
    %35 = vmatpush.msra.mxu0 0.0
    %36 = vmatpush.msra.mxu0 0.0
    %37 = vmatpush.msra.mxu0 0.0
    %38 = vmatpush.msra.mxu0 0.0
    %39 = vmatpush.msra.mxu0 0.0
    %40 = vmatpush.msra.mxu0 %v19
    %41 = vmatpush.msra.mxu0 %v18
    %42 = vmatpush.msra.mxu0 %v17
    %43 = vmatpush.msra.mxu0 %v16
    %44 = vmatmul.f32.gmra.mxu0 %v26
    %v45 = vpop.f32.mrf.mxu0
    %v46 = vadd.f32 %v22, %v45
    %47 = vdwg.mxu0
    %vm48 = vcmask 130048
    %49 = vst.msk [vmem:[#allocation2] sm:$0xff] %vm48, %v46
    // Predicated region
    $region14: #{super_simple_predictor.1} parent=1 // pred_check
      _
    $region15: #{super_simple_predictor.1} parent=1 // pred_check_branch
      %51 = sbr.rel (0) target = $region17
    $region16: #{super_simple_predictor.1} parent=1 // pred_region
      %53 = vsyncadd [#allocation3], 0
      %s55 = sshll.u32 [#allocation2], 4
      %s56 = int_to_ptr.vmem [resolvable:$true] %s55
      %s57 = sshll.u32 %s3, 4
      %s58 = int_to_ptr.hbm [resolvable:$true] %s57
      %60 = dma.vmem_to_hbm [thread:$0]  %s56, 128, %s58, [#allocation3]
    $region17: #{super_simple_predictor.1} parent=1 // pred_fallthru
      _
    // Predicated region
    $region18: #{super_simple_predictor.1} parent=1 // pred_check
      _
    $region19: #{super_simple_predictor.1} parent=1 // pred_check_branch
      %62 = sbr.rel (0) target = $region21
    $region20: #{super_simple_predictor.1} parent=1 // pred_region
      %64 = dma.done [#allocation3], 128
    $region21: #{super_simple_predictor.1} parent=1 // pred_fallthru
      _
    %65 = vsyncpa [#allocation3], 1

</llo_original>
